<compile_context>
chip_gen: v6e
topology: v6e:2x2x1
jax: 0.10.0
libtpu: 0.0.40
codegen_flags: <defaults>
</compile_context>

<pallas_src>
import jax
import jax.numpy as jnp
from jax.experimental import pallas as pl
from jax.experimental.pallas import tpu as pltpu


def _round_up(x, m):
    return ((x + m - 1) // m) * m


def _vmem_capacity_bytes():
    """Chip VMEM capacity; conservative v7x-sized fallback if unavailable."""
    try:
        return int(pltpu.get_tpu_info().vmem_capacity_bytes)
    except Exception:
        return 64 * 2**20


def _choose_tile_hw(hw, bc, itemsize, max_tile_bytes):
    """Pick the spatial (lane) tile size.

    Sized so the double-buffered (B*C, tile) slab stays inside a per-chip
    budget (8 MiB on v7x-class VMEM, wider on v5e/v6e), preferring wide
    (>= 512 lane) tiles; small inputs collapse to a single grid step.
    """
    bc_pad = _round_up(max(bc, 1), 8)
    lanes_budget = max(128, (max_tile_bytes // (2 * bc_pad * itemsize)) // 128 * 128)
    lanes = min(lanes_budget, _round_up(hw, 128))
    return max(int(lanes), 128)


def _make_mlp_kernel(num_layers, batch, chans, hw, tile_hw, inv_hw):
    """Kernel body. Ref order: (x, w0, b0, ..., w_{L-1}, b_{L-1}, out, acc)."""
    ragged = (hw % tile_hw) != 0
    n_chunks = tile_hw // 128

    def kernel(*refs):
        x_ref = refs[0]
        param_refs = refs[1:1 + 2 * num_layers]
        out_ref = refs[1 + 2 * num_layers]
        acc_ref = refs[2 + 2 * num_layers]          # (B*C, 128) f32, persistent

        k = pl.program_id(0)

        @pl.when(k == 0)
        def _init():
            acc_ref[...] = jnp.zeros_like(acc_ref)

        # Lane-dense partial spatial sum: tile_hw/128 full-vreg VPU adds into
        # the persistent accumulator.  Ragged-tail lanes are zeroed with an
        # iota mask (statically skipped when tile_hw divides H*W).
        base = k * tile_hw
        partial = None
        for j in range(n_chunks):
            chunk = x_ref[:, j * 128:(j + 1) * 128].astype(jnp.float32)
            if ragged:
                lane = jax.lax.broadcasted_iota(jnp.int32, chunk.shape, 1)
                chunk = jnp.where(base + j * 128 + lane < hw, chunk, 0.0)
            partial = chunk if partial is None else partial + chunk
        acc_ref[...] += partial

        @pl.when(k == pl.num_programs(0) - 1)
        def _finalize():
            # Single cross-lane reduce + 1/(H*W) scale -> pooled column (B*C, 1).
            pooled = jnp.sum(acc_ref[...], axis=-1, keepdims=True) * inv_hw

            # Layer 0 with the (B*C,) -> (B, C) unflatten folded in: per-batch
            # multiply + sublane reduce against the resident (C, H0) weight.
            # Nothing in the resident set scales with B.
            w0 = param_refs[0][...]                         # (C, H0) f32
            b0 = param_refs[1][...]                         # (1, H0) f32
            rows = []
            for bi in range(batch):
                sl = pooled[bi * chans:(bi + 1) * chans, :]  # (C, 1)
                rows.append(jnp.sum(sl * w0, axis=0, keepdims=True))
            act = rows[0] if batch == 1 else jnp.concatenate(rows, axis=0)
            act = act + b0                                   # (B, H0)
            if num_layers > 1:
                act = jnp.maximum(act, 0.0)

            for i in range(1, num_layers):
                wt = param_refs[2 * i][...]                  # (in, out)
                bias_i = param_refs[2 * i + 1][...]          # (1, out)
                act = jnp.dot(act, wt,
                              preferred_element_type=jnp.float32) + bias_i
                if i < num_layers - 1:
                    act = jnp.maximum(act, 0.0)

            out_ref[...] = act.astype(out_ref.dtype)

    return kernel


def mlp_forward(x_nchw, params, *, tile_hw=None):
    """Runs the MLP forward pass.

    Args:
      x_nchw: (B, C, H, W) input (PyTorch NCHW convention), read in its
              native dtype (f32 keeps torch-parity and is the fast HBM path).
      params: list of (weight, bias) with weight (out_dim, in_dim) and
              bias (out_dim,), PyTorch nn.Linear convention.
      tile_hw: optional spatial tile width (multiple of 128). Auto-sized
               (chip-VMEM-aware) if None.

    Returns:
      (B, output_dim) float32 output.
    """
    b, c, h, w = x_nchw.shape
    bc = b * c
    hw = h * w
    num_layers = len(params)
    out_dim = params[-1][0].shape[0]
    itemsize = jnp.dtype(x_nchw.dtype).itemsize

    # (B, C, H, W) -> (B*C, H*W): free dimension collapse. No dtype cast and
    # no padding pass -- the kernel reads x exactly once and masks any ragged
    # spatial tail internally.
    x_flat = x_nchw.reshape(bc, hw)

    vmem_cap = _vmem_capacity_bytes()
    max_tile_bytes = 8 * 2**20 if vmem_cap <= 64 * 2**20 else 16 * 2**20

    if tile_hw is None:
        tile_hw = _choose_tile_hw(hw, bc, itemsize, max_tile_bytes)
    tile_hw = max(128, _round_up(int(tile_hw), 128))
    tile_hw = min(tile_hw, _round_up(hw, 128))
    n_tiles = pl.cdiv(hw, tile_hw)

    # TODO(synk): in a real model, pre-transpose the (tiny) weights once at
    # init instead of per call; here it is cheap wrapper glue.
    flat_params = []
    for weight, bias in params:
        flat_params.append(jnp.transpose(weight).astype(jnp.float32))  # (in, out)
        flat_params.append(bias.reshape(1, -1).astype(jnp.float32))    # (1, out)

    kernel = _make_mlp_kernel(num_layers, b, c, hw, tile_hw, 1.0 / float(hw))

    x_spec = pl.BlockSpec((bc, tile_hw), lambda k: (0, k))

    def resident(arr):
        # Constant block index: DMA'd once, stays VMEM-resident across all
        # spatial steps.
        # TODO(synk): use pipeline_mode=pl.Buffered(1) for these constant
        # operands once single-buffering is supported by the pallas_call
        # pipeline, to halve their (already tiny) VMEM cost.
        return pl.BlockSpec(arr.shape, lambda k: (0, 0))

    in_specs = [x_spec] + [resident(p) for p in flat_params]
    out_spec = pl.BlockSpec((b, out_dim), lambda k: (0, 0))

    # Chip-aware VMEM request: double-buffered x tile + params + scratch +
    # headroom, clamped to ~75% of this chip's physical VMEM.
    bc_pad = _round_up(bc, 8)
    x_tile_bytes = bc_pad * tile_hw * itemsize
    param_bytes = sum(int(p.size) * 4 for p in flat_params)
    need = (2 * x_tile_bytes + 2 * param_bytes + bc_pad * 128 * 4
            + 2 * _round_up(b, 8) * _round_up(out_dim, 128) * 4 + 2 * 2**20)
    vmem_limit = int(min((vmem_cap * 3) // 4, max(4 * 2**20, need)))

    layer_flops = 0
    prev = c
    for weight, _ in params:
        layer_flops += 2 * b * prev * weight.shape[0]
        prev = weight.shape[0]
    cost = pl.CostEstimate(
        flops=bc * hw + layer_flops,
        transcendentals=0,
        bytes_accessed=bc * hw * itemsize + param_bytes + b * out_dim * 4,
    )

    # TODO(synk): for production-sized B*C on v7x, add a leading "parallel"
    # row-block grid axis to shard the HBM-bound pooling across the 2
    # TensorCores; at this head's size it is pure overhead.
    return pl.pallas_call(
        kernel,
        out_shape=jax.ShapeDtypeStruct((b, out_dim), jnp.float32),
        grid_spec=pltpu.PrefetchScalarGridSpec(
            num_scalar_prefetch=0,
            grid=(n_tiles,),
            in_specs=in_specs,
            out_specs=out_spec,
            scratch_shapes=[pltpu.VMEM((bc, 128), jnp.float32)],
        ),
        compiler_params=pltpu.CompilerParams(
            dimension_semantics=("arbitrary",),
            vmem_limit_bytes=vmem_limit,
        ),
        cost_estimate=cost,
    )(x_flat, *flat_params)


def _reference_forward(x_nchw, params):
    """Pure-JAX reference mirroring the PyTorch module (f32 throughout)."""
    b, c, h, w = x_nchw.shape
    act = jnp.mean(x_nchw.astype(jnp.float32).reshape(b, c, h * w), axis=-1)
    num_layers = len(params)
    for i, (weight, bias) in enumerate(params):
        act = act @ weight.T + bias
        if i < num_layers - 1:
            act = jnp.maximum(act, 0.0)
    return act


def _init_params(key, input_dim, hidden_dim, output_dim, num_layers):
    """Deterministic synthetic init for the MLP layer stack (BN=False path)."""
    hdims = [hidden_dim] * (num_layers - 1)
    dims_in = [input_dim] + hdims
    dims_out = hdims + [output_dim]
    params = []
    for n, k in zip(dims_in, dims_out):
        key, wk, bk = jax.random.split(key, 3)
        weight = jax.random.normal(wk, (k, n), dtype=jnp.float32) * 0.1
        bias = jax.random.normal(bk, (k,), dtype=jnp.float32) * 0.05
        params.append((weight, bias))
    return params


if __name__ == "__main__":
    # Shapes consistent with the module's forward:
    #   x: (batch=2, channels=4, H=16, W=16)
    #   MLP(input_dim=4, hidden_dim=32, output_dim=4, num_layers=3, BN=False)
    key = jax.random.PRNGKey(0)
    key, xk, xk2 = jax.random.split(key, 3)

    B, C, H, W = 2, 4, 16, 16
    input_dim, hidden_dim, output_dim, num_layers = C, 32, 4, 3

    x = jax.random.normal(xk, (B, C, H, W), dtype=jnp.float32)
    params = _init_params(key, input_dim, hidden_dim, output_dim, num_layers)
    ref = _reference_forward(x, params)

    # 1) Auto-tiled path: whole spatial extent fits VMEM -> single grid step.
    out = jax.block_until_ready(mlp_forward(x, params))
    assert out.shape == (B, output_dim), out.shape
    assert jnp.allclose(out, ref, atol=2e-3, rtol=2e-3), (
        f"auto-tile max abs err = {jnp.max(jnp.abs(out - ref))}")

    # 2) Forced 128-lane tile: exercises the multi-step accumulator pipeline.
    out_tiled = jax.block_until_ready(mlp_forward(x, params, tile_hw=128))
    assert jnp.allclose(out_tiled, ref, atol=2e-3, rtol=2e-3), (
        f"tiled max abs err = {jnp.max(jnp.abs(out_tiled - ref))}")

    # 3) Ragged spatial size (H*W not a multiple of 128): exercises the
    #    in-kernel lane mask that replaces the old wrapper-side jnp.pad.
    x_r = jax.random.normal(xk2, (B, C, 15, 15), dtype=jnp.float32)
    out_r = jax.block_until_ready(mlp_forward(x_r, params))
    ref_r = _reference_forward(x_r, params)
    assert jnp.allclose(out_r, ref_r, atol=2e-3, rtol=2e-3), (
        f"ragged max abs err = {jnp.max(jnp.abs(out_r - ref_r))}")

    print("KERNEL_OK")
</pallas_src>

<mosaic_0001>
module attributes {stable_mosaic.version = 11 : i64} {
  func.func @kernel(%arg0: i32, %arg1: memref<8x256xf32, #tpu.memory_space<vmem>>, %arg2: memref<4x32xf32, #tpu.memory_space<vmem>>, %arg3: memref<1x32xf32, #tpu.memory_space<vmem>>, %arg4: memref<32x32xf32, #tpu.memory_space<vmem>>, %arg5: memref<1x32xf32, #tpu.memory_space<vmem>>, %arg6: memref<32x4xf32, #tpu.memory_space<vmem>>, %arg7: memref<1x4xf32, #tpu.memory_space<vmem>>, %arg8: memref<2x4xf32, #tpu.memory_space<vmem>>, %arg9: memref<8x128xf32, #tpu.memory_space<vmem>>) attributes {dimension_semantics = [#tpu.dimension_semantics<arbitrary>], iteration_bounds = array<i64: 1>, scalar_prefetch = 0 : i64, scratch_operands = 1 : i64, tpu.core_type = #tpu.core_type<tc>, window_params = [{transform_indices = @transform_0, window_bounds = array<i64: 8, 256>}, {pipeline_mode = #tpu.pipeline_mode<synchronous>, transform_indices = @transform_1, window_bounds = array<i64: 4, 32>}, {pipeline_mode = #tpu.pipeline_mode<synchronous>, transform_indices = @transform_2, window_bounds = array<i64: 1, 32>}, {pipeline_mode = #tpu.pipeline_mode<synchronous>, transform_indices = @transform_3, window_bounds = array<i64: 32, 32>}, {pipeline_mode = #tpu.pipeline_mode<synchronous>, transform_indices = @transform_4, window_bounds = array<i64: 1, 32>}, {pipeline_mode = #tpu.pipeline_mode<synchronous>, transform_indices = @transform_5, window_bounds = array<i64: 32, 4>}, {pipeline_mode = #tpu.pipeline_mode<synchronous>, transform_indices = @transform_6, window_bounds = array<i64: 1, 4>}, {pipeline_mode = #tpu.pipeline_mode<synchronous>, transform_indices = @transform_7, window_bounds = array<i64: 2, 4>}]} {
    %c0_i32 = arith.constant 0 : i32
    %0 = arith.cmpi eq, %arg0, %c0_i32 : i32
    %1 = arith.extui %0 : i1 to i32
    %c0_i32_0 = arith.constant 0 : i32
    %2 = arith.cmpi ne, %1, %c0_i32_0 : i32
    scf.if %2 {
      %cst = arith.constant 0.000000e+00 : f32
      %12 = vector.broadcast %cst : f32 to vector<8x128xf32>
      %c0_9 = arith.constant 0 : index
      %c0_10 = arith.constant 0 : index
      %13 = vector.load %arg9[%c0_9, %c0_10] : memref<8x128xf32, #tpu.memory_space<vmem>>, vector<8x128xf32>
      tpu.vector_store %arg9[%c0_9, %c0_10], %12 {strides = array<i32>} : memref<8x128xf32, #tpu.memory_space<vmem>>, vector<8x128xf32>,
    } else {
    }
    %c0 = arith.constant 0 : index
    %c0_1 = arith.constant 0 : index
    %3 = vector.load %arg1[%c0, %c0_1] : memref<8x256xf32, #tpu.memory_space<vmem>>, vector<8x128xf32>
    %c0_2 = arith.constant 0 : index
    %c128 = arith.constant 128 : index
    %4 = vector.load %arg1[%c0_2, %c128] : memref<8x256xf32, #tpu.memory_space<vmem>>, vector<8x128xf32>
    %5 = arith.addf %3, %4 : vector<8x128xf32>
    %c0_3 = arith.constant 0 : index
    %c0_4 = arith.constant 0 : index
    %6 = vector.load %arg9[%c0_3, %c0_4] : memref<8x128xf32, #tpu.memory_space<vmem>>, vector<8x128xf32>
    %7 = arith.addf %6, %5 : vector<8x128xf32>
    %c0_5 = arith.constant 0 : index
    %c0_6 = arith.constant 0 : index
    %8 = vector.load %arg9[%c0_5, %c0_6] : memref<8x128xf32, #tpu.memory_space<vmem>>, vector<8x128xf32>
    tpu.vector_store %arg9[%c0_5, %c0_6], %7 {strides = array<i32>} : memref<8x128xf32, #tpu.memory_space<vmem>>, vector<8x128xf32>,
    %c0_i32_7 = arith.constant 0 : i32
    %9 = arith.cmpi eq, %arg0, %c0_i32_7 : i32
    %10 = arith.extui %9 : i1 to i32
    %c0_i32_8 = arith.constant 0 : i32
    %11 = arith.cmpi ne, %10, %c0_i32_8 : i32
    scf.if %11 {
      %c0_9 = arith.constant 0 : index
      %c0_10 = arith.constant 0 : index
      %12 = vector.load %arg9[%c0_9, %c0_10] : memref<8x128xf32, #tpu.memory_space<vmem>>, vector<8x128xf32>
      %cst = arith.constant dense<0.000000e+00> : vector<8xf32>
      %13 = vector.multi_reduction <add>, %12, %cst [1] : vector<8x128xf32> to vector<8xf32>
      %14 = vector.shape_cast %13 : vector<8xf32> to vector<8x1xf32>
      %cst_11 = arith.constant 3.906250e-03 : f32
      %15 = vector.broadcast %cst_11 : f32 to vector<8x1xf32>
      %16 = arith.mulf %14, %15 : vector<8x1xf32>
      %c0_12 = arith.constant 0 : index
      %c0_13 = arith.constant 0 : index
      %17 = vector.load %arg2[%c0_12, %c0_13] : memref<4x32xf32, #tpu.memory_space<vmem>>, vector<4x32xf32>
      %c0_14 = arith.constant 0 : index
      %c0_15 = arith.constant 0 : index
      %18 = vector.load %arg3[%c0_14, %c0_15] : memref<1x32xf32, #tpu.memory_space<vmem>>, vector<1x32xf32>
      %19 = vector.extract_strided_slice %16 {offsets = [0, 0], sizes = [4, 1], strides = [1, 1]} : vector<8x1xf32> to vector<4x1xf32>
      %20 = vector.broadcast %19 : vector<4x1xf32> to vector<4x32xf32>
      %21 = arith.mulf %20, %17 : vector<4x32xf32>
      %cst_16 = arith.constant dense<0.000000e+00> : vector<32xf32>
      %22 = vector.multi_reduction <add>, %21, %cst_16 [0] : vector<4x32xf32> to vector<32xf32>
      %23 = vector.shape_cast %22 : vector<32xf32> to vector<1x32xf32>
      %24 = vector.extract_strided_slice %16 {offsets = [4, 0], sizes = [4, 1], strides = [1, 1]} : vector<8x1xf32> to vector<4x1xf32>
      %25 = vector.broadcast %24 : vector<4x1xf32> to vector<4x32xf32>
      %26 = arith.mulf %25, %17 : vector<4x32xf32>
      %cst_17 = arith.constant dense<0.000000e+00> : vector<32xf32>
      %27 = vector.multi_reduction <add>, %26, %cst_17 [0] : vector<4x32xf32> to vector<32xf32>
      %28 = vector.shape_cast %27 : vector<32xf32> to vector<1x32xf32>
      %29 = tpu.concatenate %23, %28 in 0 : vector<1x32xf32>, vector<1x32xf32> -> vector<2x32xf32>
      %30 = vector.broadcast %18 : vector<1x32xf32> to vector<2x32xf32>
      %31 = arith.addf %29, %30 : vector<2x32xf32>
      %cst_18 = arith.constant 0.000000e+00 : f32
      %32 = vector.broadcast %cst_18 : f32 to vector<2x32xf32>
      %33 = arith.maximumf %31, %32 : vector<2x32xf32>
      %c0_19 = arith.constant 0 : index
      %c0_20 = arith.constant 0 : index
      %34 = vector.load %arg4[%c0_19, %c0_20] : memref<32x32xf32, #tpu.memory_space<vmem>>, vector<32x32xf32>
      %c0_21 = arith.constant 0 : index
      %c0_22 = arith.constant 0 : index
      %35 = vector.load %arg5[%c0_21, %c0_22] : memref<1x32xf32, #tpu.memory_space<vmem>>, vector<1x32xf32>
      %cst_23 = arith.constant dense<0.000000e+00> : vector<2x32xf32>
      %36 = tpu.matmul %33, %34, %cst_23 {dimension_numbers = #tpu.dot_dimension_numbers<[1], [0], [0], [1], [0, 0, 1, 1], [], []>} : vector<2x32xf32>, vector<32x32xf32>, vector<2x32xf32> -> vector<2x32xf32>
      %37 = vector.broadcast %35 : vector<1x32xf32> to vector<2x32xf32>
      %38 = arith.addf %36, %37 : vector<2x32xf32>
      %cst_24 = arith.constant 0.000000e+00 : f32
      %39 = vector.broadcast %cst_24 : f32 to vector<2x32xf32>
      %40 = arith.maximumf %38, %39 : vector<2x32xf32>
      %c0_25 = arith.constant 0 : index
      %c0_26 = arith.constant 0 : index
      %41 = vector.load %arg6[%c0_25, %c0_26] : memref<32x4xf32, #tpu.memory_space<vmem>>, vector<32x4xf32>
      %c0_27 = arith.constant 0 : index
      %c0_28 = arith.constant 0 : index
      %42 = vector.load %arg7[%c0_27, %c0_28] : memref<1x4xf32, #tpu.memory_space<vmem>>, vector<1x4xf32>
      %cst_29 = arith.constant dense<0.000000e+00> : vector<2x4xf32>
      %43 = tpu.matmul %40, %41, %cst_29 {dimension_numbers = #tpu.dot_dimension_numbers<[1], [0], [0], [1], [0, 0, 1, 1], [], []>} : vector<2x32xf32>, vector<32x4xf32>, vector<2x4xf32> -> vector<2x4xf32>
      %44 = vector.broadcast %42 : vector<1x4xf32> to vector<2x4xf32>
      %45 = arith.addf %43, %44 : vector<2x4xf32>
      %c0_30 = arith.constant 0 : index
      %c0_31 = arith.constant 0 : index
      %46 = vector.load %arg8[%c0_30, %c0_31] : memref<2x4xf32, #tpu.memory_space<vmem>>, vector<2x4xf32>
      tpu.vector_store %arg8[%c0_30, %c0_31], %45 {strides = array<i32>} : memref<2x4xf32, #tpu.memory_space<vmem>>, vector<2x4xf32>,
    } else {
    }
    return
  }
  func.func @transform_0(%arg0: i32) -> (i32, i32) {
    %c0_i32 = arith.constant 0 : i32
    %c0_i32_0 = arith.constant 0 : i32
    return %c0_i32, %arg0 : i32, i32
  }
  func.func @transform_1(%arg0: i32) -> (i32, i32) {
    %c0_i32 = arith.constant 0 : i32
    %c0_i32_0 = arith.constant 0 : i32
    %c0_i32_1 = arith.constant 0 : i32
    return %c0_i32, %c0_i32_0 : i32, i32
  }
  func.func @transform_2(%arg0: i32) -> (i32, i32) {
    %c0_i32 = arith.constant 0 : i32
    %c0_i32_0 = arith.constant 0 : i32
    %c0_i32_1 = arith.constant 0 : i32
    return %c0_i32, %c0_i32_0 : i32, i32
  }
  func.func @transform_3(%arg0: i32) -> (i32, i32) {
    %c0_i32 = arith.constant 0 : i32
    %c0_i32_0 = arith.constant 0 : i32
    %c0_i32_1 = arith.constant 0 : i32
    return %c0_i32, %c0_i32_0 : i32, i32
  }
  func.func @transform_4(%arg0: i32) -> (i32, i32) {
    %c0_i32 = arith.constant 0 : i32
    %c0_i32_0 = arith.constant 0 : i32
    %c0_i32_1 = arith.constant 0 : i32
    return %c0_i32, %c0_i32_0 : i32, i32
  }
  func.func @transform_5(%arg0: i32) -> (i32, i32) {
    %c0_i32 = arith.constant 0 : i32
    %c0_i32_0 = arith.constant 0 : i32
    %c0_i32_1 = arith.constant 0 : i32
    return %c0_i32, %c0_i32_0 : i32, i32
  }
  func.func @transform_6(%arg0: i32) -> (i32, i32) {
    %c0_i32 = arith.constant 0 : i32
    %c0_i32_0 = arith.constant 0 : i32
    %c0_i32_1 = arith.constant 0 : i32
    return %c0_i32, %c0_i32_0 : i32, i32
  }
  func.func @transform_7(%arg0: i32) -> (i32, i32) {
    %c0_i32 = arith.constant 0 : i32
    %c0_i32_0 = arith.constant 0 : i32
    %c0_i32_1 = arith.constant 0 : i32
    return %c0_i32, %c0_i32_0 : i32, i32
  }
}

</mosaic_0001>

<llo_original>
// kernel: tpu_custom_call.1
$region0: #{tpu_custom_call.1}
  #allocation0 [shape = 'u32[]', space=smem, size = 0x4, offset = 0x4, fixed_abs, tag = 'smem constant byte address 0x4 - core index']
  #allocation1 [shape = 'u32[144,128]{1,0:T(1,128)}', space=vmem, size = 0x12000, scoped, tag = 'internal scratch']
  #allocation2 [shape = 'f32[8,128]{1,0:T(8,128)}', space=vmem, size = 0x1000, scoped, tag = 'scratch operand']
  %s0 = inlined_call_operand.hbm [shape: f32[8,256], index: 0, kind: input, shape index: {}]
  %s1 = inlined_call_operand.vmem [shape: f32[4,32], index: 1, kind: input, shape index: {}]
  %s2 = inlined_call_operand.vmem [shape: f32[1,32], index: 2, kind: input, shape index: {}]
  %s3 = inlined_call_operand.vmem [shape: f32[32,32], index: 3, kind: input, shape index: {}]
  %s4 = inlined_call_operand.vmem [shape: f32[1,32], index: 4, kind: input, shape index: {}]
  %s5 = inlined_call_operand.vmem [shape: f32[32,4], index: 5, kind: input, shape index: {}]
  %s6 = inlined_call_operand.vmem [shape: f32[1,4], index: 6, kind: input, shape index: {}]
  %s7 = inlined_call_operand.hbm [shape: f32[2,4], index: 7, kind: output, shape index: {}]
  %s8 = sld [smem:[#allocation0]]
  $region50: #{tpu_custom_call.1} parent=0
    _
  %s10 = ssub.s32 1, %s8
  %s11 = scalar_select 0, %s10, %s8
  $region1: #{tpu_custom_call.1} parent=0
    #allocation3 [shape = 'u8[8192]{0}', space=vmem, size = 0x2000, scoped, tag = 'input window, operand 0, single buffered']
    #allocation4 [shape = 's32[1]{0}', space=sflag, size = 0x4, scoped, tag = 'scoped memory for tpu_custom_call.1']
    #allocation5 [shape = 's32[1]{0}', space=sflag, size = 0x4, scoped, tag = 'scoped memory for tpu_custom_call.1']
    #allocation6 [shape = 'u8[1024]{0}', space=vmem, size = 0x400, scoped, tag = 'output window, operand 0, single buffered']
    %12 = vsyncpa [#allocation4], 0
    %13 = vsyncpa [#allocation5], 0
    // Predicated region
    $region2: #{tpu_custom_call.1} parent=1 // pred_check
      _
    $region3: #{tpu_custom_call.1} parent=1 // pred_check_branch
      %15 = sbr.rel (0) target = $region5
    $region4: #{tpu_custom_call.1} parent=1 // pred_region
      %s17 = ssub.s32 256, 256
      %18 = vsyncadd [#allocation4], %s17
      %s20 = sshll.u32 [#allocation3], 4
      %s21 = int_to_ptr.vmem [resolvable:$true] %s20
      %23 = dma.hbm_to_vmem [thread:$0]  %s0, 256, %s21, [#allocation4]
    $region5: #{tpu_custom_call.1} parent=1 // pred_fallthru
      _
    // Predicated region
    $region6: #{tpu_custom_call.1} parent=1 // pred_check
      _
    $region7: #{tpu_custom_call.1} parent=1 // pred_check_branch
      %25 = sbr.rel (0) target = $region9
    $region8: #{tpu_custom_call.1} parent=1 // pred_region
      _
    $region9: #{tpu_custom_call.1} parent=1 // pred_fallthru
      _
    // Predicated region
    $region10: #{tpu_custom_call.1} parent=1 // pred_check
      _
    $region11: #{tpu_custom_call.1} parent=1 // pred_check_branch
      %27 = sbr.rel (0) target = $region13
    $region12: #{tpu_custom_call.1} parent=1 // pred_region
      _
    $region13: #{tpu_custom_call.1} parent=1 // pred_fallthru
      _
    // Predicated region
    $region14: #{tpu_custom_call.1} parent=1 // pred_check
      _
    $region15: #{tpu_custom_call.1} parent=1 // pred_check_branch
      %29 = sbr.rel (0) target = $region17
    $region16: #{tpu_custom_call.1} parent=1 // pred_region
      _
    $region17: #{tpu_custom_call.1} parent=1 // pred_fallthru
      _
    // Predicated region
    $region18: #{tpu_custom_call.1} parent=1 // pred_check
      _
    $region19: #{tpu_custom_call.1} parent=1 // pred_check_branch
      %31 = sbr.rel (0) target = $region21
    $region20: #{tpu_custom_call.1} parent=1 // pred_region
      _
    $region21: #{tpu_custom_call.1} parent=1 // pred_fallthru
      _
    // Predicated region
    $region22: #{tpu_custom_call.1} parent=1 // pred_check
      _
    $region23: #{tpu_custom_call.1} parent=1 // pred_check_branch
      %33 = sbr.rel (0) target = $region25
    $region24: #{tpu_custom_call.1} parent=1 // pred_region
      _
    $region25: #{tpu_custom_call.1} parent=1 // pred_fallthru
      _
    // Predicated region
    $region26: #{tpu_custom_call.1} parent=1 // pred_check
      _
    $region27: #{tpu_custom_call.1} parent=1 // pred_check_branch
      %35 = sbr.rel (0) target = $region29
    $region28: #{tpu_custom_call.1} parent=1 // pred_region
      _
    $region29: #{tpu_custom_call.1} parent=1 // pred_fallthru
      _
    // Predicated region
    $region30: #{tpu_custom_call.1} parent=1 // pred_check
      _
    $region31: #{tpu_custom_call.1} parent=1 // pred_check_branch
      %37 = sbr.rel (0) target = $region33
    $region32: #{tpu_custom_call.1} parent=1 // pred_region
      %38 = dma.done [#allocation4], 256
    $region33: #{tpu_custom_call.1} parent=1 // pred_fallthru
      _
    %p39 = scmp.eq.s32.totalorder 0, 0
    // Predicated region
    $region34: #{tpu_custom_call.1} parent=1 // pred_check
      %p40 = pneg %p39
    $region35: #{tpu_custom_call.1} parent=1 // pred_check_branch
      %42 = sbr.rel (%p40) target = $region37
    $region36: #{tpu_custom_call.1} parent=1 // pred_region
      %43 = vst [vmem:[#allocation2] sm:$0xff] 0.0
    $region37: #{tpu_custom_call.1} parent=1 // pred_fallthru
      _
    %v44 = vld [vmem:[#allocation3] sm:$0xff]
    %v45 = vld [vmem:[#allocation3 + $0x8] sm:$0xff]
    %v46 = vadd.f32 %v44, %v45
    %v47 = vld [vmem:[#allocation2] sm:$0xff]
    %v48 = vadd.f32 %v47, %v46
    %49 = vst [vmem:[#allocation2] sm:$0xff] %v48
    // Predicated region
    $region38: #{tpu_custom_call.1} parent=1 // pred_check
      %p50 = pneg %p39
    $region39: #{tpu_custom_call.1} parent=1 // pred_check_branch
      %52 = sbr.rel (%p50) target = $region41
    $region40: #{tpu_custom_call.1} parent=1 // pred_region
      %v53 = vld [vmem:[#allocation2] sm:$0xff]
      %54 = vadd.xlane.f32.xlu0 %v53
      %v55 = vpop.xlane.xlu0 %54
      %v56 = vmul.f32 %v55, 0.00390625
      %v57 = vld [vmem:[%s1] sm:$0xf]
      %v58 = vld [vmem:[%s2] sm:$0x1]
      %v59 = vmul.f32 %v56, %v57
      %vm60 = vcmask 257024
      %v61 = vsel %vm60, %v59, 0.0
      %v62 = vrot.slane %v61, 4
      %v63 = vadd.f32 %v61, %v62
      %v64 = vrot.slane %v63, 2
      %v65 = vadd.f32 %v63, %v64
      %v66 = vrot.slane %v65, 1
      %v67 = vadd.f32 %v65, %v66
      %v69 = vrot.slane %v57, 4
      %v71 = vmul.f32 %v56, %v69
      %v73 = vrot.slane %v71, 4
      %v75 = vsel %vm60, %v73, 0.0
      %v76 = vrot.slane %v75, 4
      %v77 = vadd.f32 %v75, %v76
      %v78 = vrot.slane %v77, 2
      %v79 = vadd.f32 %v77, %v78
      %v80 = vrot.slane %v79, 1
      %v81 = vadd.f32 %v79, %v80
      %vm82 = vcmask 1040384
      %v83 = vsel %vm82, %v67, %v81
      %v85 = vlaneseq
      %v86 = vshrl.u32 %v85, 7
      %v87 = vsub.s32 0, %v86
      %v88 = vrot.slane %v58, %v87
      %v90 = vadd.f32 %v83, %v88
      %v91 = vmax.f32 %v90, 0.0
      %v92 = vld [vmem:[%s3] sm:$0xff]
      %v93 = vld [vmem:[%s3 + $0x8] sm:$0xff]
      %v94 = vld [vmem:[%s3 + $0x10] sm:$0xff]
      %v95 = vld [vmem:[%s3 + $0x18] sm:$0xff]
      %v96 = vld [vmem:[%s4] sm:$0x1]
      %v98 = vlaneseq
      %v99 = vshrl.u32 %v98, 7
      %v100 = vsub.s32 0, %v99
      %v101 = vrot.slane %v96, %v100
      %vm103 = vcmask 261120
      %v105 = vsel %vm103, %v91, 0
      %107 = vmatprep.subr.mxu0 0.0
      %108 = vmatpush1.msra.mxu0 0.0
      %109 = vmatprep.subr.mxu0 0.0
      %110 = vmatpush1.msra.mxu0 0.0
      %111 = vmatprep.subr.mxu0 0.0
      %112 = vmatpush1.msra.mxu0 0.0
      %113 = vmatprep.subr.mxu0 0.0
      %114 = vmatpush1.msra.mxu0 0.0
      %115 = vmatprep.subr.mxu0 0.0
      %116 = vmatpush1.msra.mxu0 0.0
      %117 = vmatprep.subr.mxu0 0.0
      %118 = vmatpush1.msra.mxu0 0.0
      %119 = vmatprep.subr.mxu0 0.0
      %120 = vmatpush1.msra.mxu0 0.0
      %121 = vmatprep.subr.mxu0 0.0
      %122 = vmatpush1.msra.mxu0 0.0
      %123 = vmatprep.subr.mxu0 0.0
      %124 = vmatpush1.msra.mxu0 0.0
      %125 = vmatprep.subr.mxu0 0.0
      %126 = vmatpush1.msra.mxu0 0.0
      %127 = vmatprep.subr.mxu0 0.0
      %128 = vmatpush1.msra.mxu0 0.0
      %129 = vmatprep.subr.mxu0 0.0
      %130 = vmatpush1.msra.mxu0 0.0
      %131 = vmatprep.subr.mxu0 0.0
      %132 = vmatpush1.msra.mxu0 %v95
      %133 = vmatprep.subr.mxu0 0.0
      %134 = vmatpush1.msra.mxu0 %v94
      %135 = vmatprep.subr.mxu0 0.0
      %136 = vmatpush1.msra.mxu0 %v93
      %137 = vmatprep.subr.mxu0 0.0
      %138 = vmatpush1.msra.mxu0 %v92
      %139 = vmatprep.subr.mxu0 0.0
      %140 = vmatpush2.msra.mxu0 0.0
      %141 = vmatprep.subr.mxu0 0.0
      %142 = vmatpush2.msra.mxu0 0.0
      %143 = vmatprep.subr.mxu0 0.0
      %144 = vmatpush2.msra.mxu0 0.0
      %145 = vmatprep.subr.mxu0 0.0
      %146 = vmatpush2.msra.mxu0 0.0
      %147 = vmatprep.subr.mxu0 0.0
      %148 = vmatpush2.msra.mxu0 0.0
      %149 = vmatprep.subr.mxu0 0.0
      %150 = vmatpush2.msra.mxu0 0.0
      %151 = vmatprep.subr.mxu0 0.0
      %152 = vmatpush2.msra.mxu0 0.0
      %153 = vmatprep.subr.mxu0 0.0
      %154 = vmatpush2.msra.mxu0 0.0
      %155 = vmatprep.subr.mxu0 0.0
      %156 = vmatpush2.msra.mxu0 0.0
      %157 = vmatprep.subr.mxu0 0.0
      %158 = vmatpush2.msra.mxu0 0.0
      %159 = vmatprep.subr.mxu0 0.0
      %160 = vmatpush2.msra.mxu0 0.0
      %161 = vmatprep.subr.mxu0 0.0
      %162 = vmatpush2.msra.mxu0 0.0
      %163 = vmatprep.subr.mxu0 0.0
      %164 = vmatpush2.msra.mxu0 0.0
      %165 = vmatprep.subr.mxu0 0.0
      %166 = vmatpush2.msra.mxu0 0.0
      %167 = vmatprep.subr.mxu0 0.0
      %168 = vmatpush2.msra.mxu0 0.0
      %169 = vmatprep.subr.mxu0 0.0
      %170 = vmatpush2.msra.mxu0 0.0
      %171 = vmatprep.mubr.f32.mxu0 0.0
      %172 = vmatmul.mubr.f32.gmra.mxu0 %v105
      %v173 = vpop.f32.mrf.mxu0
      %v174 = vadd.f32 %v101, %v173
      %v175 = vpop.f32.mrf.mxu0
      %176 = vdwg.mxu0
      %v177 = vmax.f32 %v174, 0.0
      %v178 = vld [vmem:[%s5] sm:$0xff]
      %v179 = vld [vmem:[%s5 + $0x8] sm:$0xff]
      %v180 = vld [vmem:[%s5 + $0x10] sm:$0xff]
      %v181 = vld [vmem:[%s5 + $0x18] sm:$0xff]
      %v182 = vld [vmem:[%s6] sm:$0x1]
      %v184 = vlaneseq
      %v185 = vshrl.u32 %v184, 7
      %v186 = vsub.s32 0, %v185
      %v187 = vrot.slane %v182, %v186
      %v190 = vsel %vm103, %v177, 0
      %192 = vmatprep.subr.mxu0 0.0
      %193 = vmatpush1.msra.mxu0 0.0
      %194 = vmatprep.subr.mxu0 0.0
      %195 = vmatpush1.msra.mxu0 0.0
      %196 = vmatprep.subr.mxu0 0.0
      %197 = vmatpush1.msra.mxu0 0.0
      %198 = vmatprep.subr.mxu0 0.0
      %199 = vmatpush1.msra.mxu0 0.0
      %200 = vmatprep.subr.mxu0 0.0
      %201 = vmatpush1.msra.mxu0 0.0
      %202 = vmatprep.subr.mxu0 0.0
      %203 = vmatpush1.msra.mxu0 0.0
      %204 = vmatprep.subr.mxu0 0.0
      %205 = vmatpush1.msra.mxu0 0.0
      %206 = vmatprep.subr.mxu0 0.0
      %207 = vmatpush1.msra.mxu0 0.0
      %208 = vmatprep.subr.mxu0 0.0
      %209 = vmatpush1.msra.mxu0 0.0
      %210 = vmatprep.subr.mxu0 0.0
      %211 = vmatpush1.msra.mxu0 0.0
      %212 = vmatprep.subr.mxu0 0.0
      %213 = vmatpush1.msra.mxu0 0.0
      %214 = vmatprep.subr.mxu0 0.0
      %215 = vmatpush1.msra.mxu0 0.0
      %216 = vmatprep.subr.mxu0 0.0
      %217 = vmatpush1.msra.mxu0 %v181
      %218 = vmatprep.subr.mxu0 0.0
      %219 = vmatpush1.msra.mxu0 %v180
      %220 = vmatprep.subr.mxu0 0.0
      %221 = vmatpush1.msra.mxu0 %v179
      %222 = vmatprep.subr.mxu0 0.0
      %223 = vmatpush1.msra.mxu0 %v178
      %224 = vmatprep.subr.mxu0 0.0
      %225 = vmatpush2.msra.mxu0 0.0
      %226 = vmatprep.subr.mxu0 0.0
      %227 = vmatpush2.msra.mxu0 0.0
      %228 = vmatprep.subr.mxu0 0.0
      %229 = vmatpush2.msra.mxu0 0.0
      %230 = vmatprep.subr.mxu0 0.0
      %231 = vmatpush2.msra.mxu0 0.0
      %232 = vmatprep.subr.mxu0 0.0
      %233 = vmatpush2.msra.mxu0 0.0
      %234 = vmatprep.subr.mxu0 0.0
      %235 = vmatpush2.msra.mxu0 0.0
      %236 = vmatprep.subr.mxu0 0.0
      %237 = vmatpush2.msra.mxu0 0.0
      %238 = vmatprep.subr.mxu0 0.0
      %239 = vmatpush2.msra.mxu0 0.0
      %240 = vmatprep.subr.mxu0 0.0
      %241 = vmatpush2.msra.mxu0 0.0
      %242 = vmatprep.subr.mxu0 0.0
      %243 = vmatpush2.msra.mxu0 0.0
      %244 = vmatprep.subr.mxu0 0.0
      %245 = vmatpush2.msra.mxu0 0.0
      %246 = vmatprep.subr.mxu0 0.0
      %247 = vmatpush2.msra.mxu0 0.0
      %248 = vmatprep.subr.mxu0 0.0
      %249 = vmatpush2.msra.mxu0 0.0
      %250 = vmatprep.subr.mxu0 0.0
      %251 = vmatpush2.msra.mxu0 0.0
      %252 = vmatprep.subr.mxu0 0.0
      %253 = vmatpush2.msra.mxu0 0.0
      %254 = vmatprep.subr.mxu0 0.0
      %255 = vmatpush2.msra.mxu0 0.0
      %256 = vmatprep.mubr.f32.mxu0 0.0
      %257 = vmatmul.mubr.f32.gmra.mxu0 %v190
      %v258 = vpop.f32.mrf.mxu0
      %v259 = vadd.f32 %v187, %v258
      %v260 = vpop.f32.mrf.mxu0
      %261 = vdwg.mxu0
      %vm262 = vcmask 25600
      %263 = vst.msk [vmem:[#allocation6] sm:$0x3] %vm262, %v259
    $region41: #{tpu_custom_call.1} parent=1 // pred_fallthru
      _
    // Predicated region
    $region42: #{tpu_custom_call.1} parent=1 // pred_check
      _
    $region43: #{tpu_custom_call.1} parent=1 // pred_check_branch
      %265 = sbr.rel (0) target = $region45
    $region44: #{tpu_custom_call.1} parent=1 // pred_region
      %s267 = ssub.s32 32, 32
      %268 = vsyncadd [#allocation5], %s267
      %s270 = sshll.u32 [#allocation6], 4
      %s271 = int_to_ptr.vmem [resolvable:$true] %s270
      %273 = dma.vmem_to_hbm [thread:$0]  %s271, 32, %s7, [#allocation5]
    $region45: #{tpu_custom_call.1} parent=1 // pred_fallthru
      _
    // Predicated region
    $region46: #{tpu_custom_call.1} parent=1 // pred_check
      _
    $region47: #{tpu_custom_call.1} parent=1 // pred_check_branch
      %275 = sbr.rel (0) target = $region49
    $region48: #{tpu_custom_call.1} parent=1 // pred_region
      %276 = dma.done [#allocation5], 32
    $region49: #{tpu_custom_call.1} parent=1 // pred_fallthru
      _
    %277 = vsyncpa [#allocation4], 1
    %278 = vsyncpa [#allocation5], 1

</llo_original>
